<compile_context>
chip_gen: v7x
topology: tpu7x:2x2x1
jax: 0.10.0
libtpu: 0.0.40
codegen_flags: <defaults>
</compile_context>

<pallas_src>
import jax
import jax.numpy as jnp
from jax.experimental import pallas as pl
from jax.experimental.pallas import tpu as pltpu

# ------------------------- model dimensions (small) -------------------------
B = 16            # batch
D_IN = 16         # observable / input dim
H_ENC = 32        # encoder hidden
H_FWD = 32        # forward-operator hidden
H_DEC = 32        # decoder hidden
LAT = 8           # latent dim

ENCODER_LAYERS = [D_IN, H_ENC, (LAT, LAT)]
FORWARD_LAYERS = [LAT, H_FWD, (LAT, LAT)]
DECODER_LAYERS = [LAT, H_DEC, D_IN]

# ------------------------- packed parameter slab layout -----------------------
P_COLS = 128                 # lane-dense slab width
R_WE_H  = 0                  # (D_IN,  H_ENC)   rows   0..15
R_WE_HD = 16                 # (H_ENC, 2*LAT)   rows  16..47  (fused mu|logvar)
R_WF_H  = 48                 # (LAT,   H_FWD)   rows  48..55
R_WF_HD = 56                 # (H_FWD, 2*LAT)   rows  56..87  (fused mu|logvar)
R_WD_H  = 88                 # (LAT,   H_DEC)   rows  88..95
R_WD_O  = 96                 # (H_DEC, D_IN)    rows  96..127
R_BIAS  = 128                # 6 bias rows (+2 pad) rows 128..135
P_ROWS  = 136                # multiple of 8

# packed output column offsets (one (B, 128) lane-dense slab)
OFF_XPRED = 0
OFF_XID   = D_IN
OFF_MU1   = 2 * D_IN
OFF_LV1   = 2 * D_IN + LAT
OFF_MU2   = 2 * D_IN + 2 * LAT
OFF_LV2   = 2 * D_IN + 3 * LAT
OUT_USED  = 2 * D_IN + 4 * LAT          # = 64
OUT_PAD   = P_COLS - OUT_USED           # = 64


# ------------------------------ Pallas kernel --------------------------------
def vae_fwd_kernel(x_ref, eps_ref, p_ref, out_ref):
    f32 = jnp.float32

    x = x_ref[...]                                  # (B, D_IN)
    eps = eps_ref[...]                              # (B, 2*LAT)
    eps1 = eps[:, 0:LAT]
    eps2 = eps[:, LAT:2 * LAT]

    # --- weights (static, 8-row-aligned slices of the packed slab) ---
    we_h  = p_ref[R_WE_H:R_WE_H + D_IN,    0:H_ENC]      # (16, 32)
    we_hd = p_ref[R_WE_HD:R_WE_HD + H_ENC, 0:2 * LAT]    # (32, 16) mu|lv fused
    wf_h  = p_ref[R_WF_H:R_WF_H + LAT,     0:H_FWD]      # (8, 32)
    wf_hd = p_ref[R_WF_HD:R_WF_HD + H_FWD, 0:2 * LAT]    # (32, 16) mu|lv fused
    wd_h  = p_ref[R_WD_H:R_WD_H + LAT,     0:H_DEC]      # (8, 32)
    wd_o  = p_ref[R_WD_O:R_WD_O + H_DEC,   0:D_IN]       # (32, 16)

    # --- biases: single aligned 8-row load, then in-register slices ---
    bias_blk = p_ref[R_BIAS:R_BIAS + 8, :]               # (8, 128)
    be_h  = bias_blk[0:1, 0:H_ENC]
    be_hd = bias_blk[1:2, 0:2 * LAT]
    bf_h  = bias_blk[2:3, 0:H_FWD]
    bf_hd = bias_blk[3:4, 0:2 * LAT]
    bd_h  = bias_blk[4:5, 0:H_DEC]
    bd_o  = bias_blk[5:6, 0:D_IN]

    # ---- encoder: Linear -> tanh -> fused (mu | logvar) head ----
    h1 = jnp.tanh(jnp.dot(x, we_h, preferred_element_type=f32) + be_h)
    head1 = jnp.dot(h1, we_hd, preferred_element_type=f32) + be_hd     # (B, 16)
    mu1 = head1[:, 0:LAT]
    lv1 = head1[:, LAT:2 * LAT]

    # ---- reparameterize: z_t = mu1 + eps1 * exp(0.5 * logvar1) ----
    z_t = mu1 + eps1 * jnp.exp(0.5 * lv1)

    # ---- forward operator: Linear -> tanh -> fused (mu | logvar) head ----
    h2 = jnp.tanh(jnp.dot(z_t, wf_h, preferred_element_type=f32) + bf_h)
    head2 = jnp.dot(h2, wf_hd, preferred_element_type=f32) + bf_hd     # (B, 16)
    mu2 = head2[:, 0:LAT]
    lv2 = head2[:, LAT:2 * LAT]

    # ---- reparameterize again ----
    z_t1 = mu2 + eps2 * jnp.exp(0.5 * lv2)

    # ---- decoder, fused over [z_t1; z_t] stacked along the batch axis ----
    z_cat = jnp.concatenate([z_t1, z_t], axis=0)                       # (2B, LAT)
    d = jnp.tanh(jnp.dot(z_cat, wd_h, preferred_element_type=f32) + bd_h)
    dec = jnp.dot(d, wd_o, preferred_element_type=f32) + bd_o          # (2B, D_IN)
    x_pred = dec[0:B, :]
    x_id   = dec[B:2 * B, :]

    # ---- single lane-dense packed output store ----
    pad = jnp.zeros((B, OUT_PAD), f32)
    out_ref[...] = jnp.concatenate(
        [x_pred, x_id, mu1, lv1, mu2, lv2, pad], axis=1)               # (B, 128)


# ------------------------------ wrapper ---------------------------------------
def pack_params(p):
    """Pack all weights/biases into one lane-padded f32[P_ROWS, P_COLS] slab."""
    we_head = jnp.concatenate([p["we_mu"], p["we_lv"]], axis=1)   # (H_ENC, 2*LAT)
    be_head = jnp.concatenate([p["be_mu"], p["be_lv"]], axis=1)   # (1, 2*LAT)
    wf_head = jnp.concatenate([p["wf_mu"], p["wf_lv"]], axis=1)   # (H_FWD, 2*LAT)
    bf_head = jnp.concatenate([p["bf_mu"], p["bf_lv"]], axis=1)   # (1, 2*LAT)

    slab = jnp.zeros((P_ROWS, P_COLS), jnp.float32)
    slab = slab.at[R_WE_H:R_WE_H + D_IN,    0:H_ENC].set(p["we_h"])
    slab = slab.at[R_WE_HD:R_WE_HD + H_ENC, 0:2 * LAT].set(we_head)
    slab = slab.at[R_WF_H:R_WF_H + LAT,     0:H_FWD].set(p["wf_h"])
    slab = slab.at[R_WF_HD:R_WF_HD + H_FWD, 0:2 * LAT].set(wf_head)
    slab = slab.at[R_WD_H:R_WD_H + LAT,     0:H_DEC].set(p["wd_h"])
    slab = slab.at[R_WD_O:R_WD_O + H_DEC,   0:D_IN].set(p["wd_o"])
    slab = slab.at[R_BIAS + 0, 0:H_ENC].set(p["be_h"][0])
    slab = slab.at[R_BIAS + 1, 0:2 * LAT].set(be_head[0])
    slab = slab.at[R_BIAS + 2, 0:H_FWD].set(p["bf_h"][0])
    slab = slab.at[R_BIAS + 3, 0:2 * LAT].set(bf_head[0])
    slab = slab.at[R_BIAS + 4, 0:H_DEC].set(p["bd_h"][0])
    slab = slab.at[R_BIAS + 5, 0:D_IN].set(p["bd_o"][0])
    return slab


def vae_fwd(x, eps, p_slab):
    """x: (B, D_IN); eps: (B, 2*LAT) reparameterization noise; p_slab: packed params."""
    out = pl.pallas_call(
        vae_fwd_kernel,
        out_shape=jax.ShapeDtypeStruct((B, P_COLS), jnp.float32),
        grid_spec=pltpu.PrefetchScalarGridSpec(
            num_scalar_prefetch=0,
            grid=(1,),                                 # single invocation: problem is tiny
            in_specs=[
                pl.BlockSpec((B, D_IN), lambda i: (0, 0)),
                pl.BlockSpec((B, 2 * LAT), lambda i: (0, 0)),
                pl.BlockSpec((P_ROWS, P_COLS), lambda i: (0, 0)),
            ],
            out_specs=pl.BlockSpec((B, P_COLS), lambda i: (0, 0)),
        ),
        compiler_params=pltpu.CompilerParams(
            dimension_semantics=("arbitrary",),        # no megacore split at this size
        ),
    )(x, eps, p_slab)

    x_pred = out[:, OFF_XPRED:OFF_XPRED + D_IN]
    x_id   = out[:, OFF_XID:OFF_XID + D_IN]
    mu1    = out[:, OFF_MU1:OFF_MU1 + LAT]
    lv1    = out[:, OFF_LV1:OFF_LV1 + LAT]
    mu2    = out[:, OFF_MU2:OFF_MU2 + LAT]
    lv2    = out[:, OFF_LV2:OFF_LV2 + LAT]
    return x_pred, x_id, mu1, lv1, mu2, lv2


# -------------------------- param init (deterministic) -------------------------
def init_params(key):
    def linear(key, fan_in, fan_out):
        kw, kb = jax.random.split(key)
        bound = 1.0 / jnp.sqrt(fan_in)
        w = jax.random.uniform(kw, (fan_in, fan_out), jnp.float32, -bound, bound)
        b = jax.random.uniform(kb, (1, fan_out), jnp.float32, -bound, bound)
        return w, b

    keys = jax.random.split(key, 8)
    p = {}
    # encoder: [D_IN, H_ENC, (LAT, LAT)]
    p["we_h"], p["be_h"] = linear(keys[0], D_IN, H_ENC)
    p["we_mu"], p["be_mu"] = linear(keys[1], H_ENC, LAT)
    p["we_lv"], p["be_lv"] = linear(keys[2], H_ENC, LAT)
    # forward operator: [LAT, H_FWD, (LAT, LAT)]
    p["wf_h"], p["bf_h"] = linear(keys[3], LAT, H_FWD)
    p["wf_mu"], p["bf_mu"] = linear(keys[4], H_FWD, LAT)
    p["wf_lv"], p["bf_lv"] = linear(keys[5], H_FWD, LAT)
    # decoder: [LAT, H_DEC, D_IN]
    p["wd_h"], p["bd_h"] = linear(keys[6], LAT, H_DEC)
    p["wd_o"], p["bd_o"] = linear(keys[7], H_DEC, D_IN)
    return p


# ------------------------------ pure-JAX reference -----------------------------
def vae_fwd_ref(x, eps1, eps2, p):
    h1 = jnp.tanh(x @ p["we_h"] + p["be_h"])
    mu1 = h1 @ p["we_mu"] + p["be_mu"]
    lv1 = h1 @ p["we_lv"] + p["be_lv"]
    z_t = mu1 + eps1 * jnp.exp(0.5 * lv1)
    h2 = jnp.tanh(z_t @ p["wf_h"] + p["bf_h"])
    mu2 = h2 @ p["wf_mu"] + p["bf_mu"]
    lv2 = h2 @ p["wf_lv"] + p["bf_lv"]
    z_t1 = mu2 + eps2 * jnp.exp(0.5 * lv2)
    x_pred = jnp.tanh(z_t1 @ p["wd_h"] + p["bd_h"]) @ p["wd_o"] + p["bd_o"]
    x_id = jnp.tanh(z_t @ p["wd_h"] + p["bd_h"]) @ p["wd_o"] + p["bd_o"]
    return x_pred, x_id, mu1, lv1, mu2, lv2


# ----------------------------------- main --------------------------------------
if __name__ == "__main__":
    key = jax.random.PRNGKey(0)
    k_params, k_x, k_e = jax.random.split(key, 3)

    params = init_params(k_params)
    p_slab = pack_params(params)                      # one-time param packing
    x = jax.random.normal(k_x, (B, D_IN), jnp.float32)
    eps = jax.random.normal(k_e, (B, 2 * LAT), jnp.float32)   # torch.randn_like noise
    eps1 = eps[:, :LAT]
    eps2 = eps[:, LAT:]

    outs = vae_fwd(x, eps, p_slab)
    outs = jax.block_until_ready(outs)

    refs = vae_fwd_ref(x, eps1, eps2, params)
    for o, r in zip(outs, refs):
        assert o.shape == r.shape
        assert jnp.allclose(o, r, atol=2e-5, rtol=1e-5), float(jnp.max(jnp.abs(o - r)))

    print("KERNEL_OK")
</pallas_src>

<mosaic_0001>
module attributes {stable_mosaic.version = 11 : i64} {
  func.func @vae_fwd_kernel(%arg0: i32, %arg1: memref<16x16xf32, #tpu.memory_space<vmem>>, %arg2: memref<16x16xf32, #tpu.memory_space<vmem>>, %arg3: memref<136x128xf32, #tpu.memory_space<vmem>>, %arg4: memref<16x128xf32, #tpu.memory_space<vmem>>) attributes {dimension_semantics = [#tpu.dimension_semantics<arbitrary>], iteration_bounds = array<i64: 1>, scalar_prefetch = 0 : i64, scratch_operands = 0 : i64, tpu.core_type = #tpu.core_type<tc>, window_params = [{pipeline_mode = #tpu.pipeline_mode<synchronous>, transform_indices = @transform_0, window_bounds = array<i64: 16, 16>}, {pipeline_mode = #tpu.pipeline_mode<synchronous>, transform_indices = @transform_1, window_bounds = array<i64: 16, 16>}, {pipeline_mode = #tpu.pipeline_mode<synchronous>, transform_indices = @transform_2, window_bounds = array<i64: 136, 128>}, {pipeline_mode = #tpu.pipeline_mode<synchronous>, transform_indices = @transform_3, window_bounds = array<i64: 16, 128>}]} {
    %c0 = arith.constant 0 : index
    %c0_0 = arith.constant 0 : index
    %0 = vector.load %arg1[%c0, %c0_0] : memref<16x16xf32, #tpu.memory_space<vmem>>, vector<16x16xf32>
    %c0_1 = arith.constant 0 : index
    %c0_2 = arith.constant 0 : index
    %1 = vector.load %arg2[%c0_1, %c0_2] : memref<16x16xf32, #tpu.memory_space<vmem>>, vector<16x16xf32>
    %2 = vector.extract_strided_slice %1 {offsets = [0, 0], sizes = [16, 8], strides = [1, 1]} : vector<16x16xf32> to vector<16x8xf32>
    %3 = vector.extract_strided_slice %1 {offsets = [0, 8], sizes = [16, 8], strides = [1, 1]} : vector<16x16xf32> to vector<16x8xf32>
    %c0_3 = arith.constant 0 : index
    %c0_4 = arith.constant 0 : index
    %4 = vector.load %arg3[%c0_3, %c0_4] : memref<136x128xf32, #tpu.memory_space<vmem>>, vector<16x32xf32>
    %c16 = arith.constant 16 : index
    %c0_5 = arith.constant 0 : index
    %5 = vector.load %arg3[%c16, %c0_5] : memref<136x128xf32, #tpu.memory_space<vmem>>, vector<32x16xf32>
    %c48 = arith.constant 48 : index
    %c0_6 = arith.constant 0 : index
    %6 = vector.load %arg3[%c48, %c0_6] : memref<136x128xf32, #tpu.memory_space<vmem>>, vector<8x32xf32>
    %c56 = arith.constant 56 : index
    %c0_7 = arith.constant 0 : index
    %7 = vector.load %arg3[%c56, %c0_7] : memref<136x128xf32, #tpu.memory_space<vmem>>, vector<32x16xf32>
    %c88 = arith.constant 88 : index
    %c0_8 = arith.constant 0 : index
    %8 = vector.load %arg3[%c88, %c0_8] : memref<136x128xf32, #tpu.memory_space<vmem>>, vector<8x32xf32>
    %c96 = arith.constant 96 : index
    %c0_9 = arith.constant 0 : index
    %9 = vector.load %arg3[%c96, %c0_9] : memref<136x128xf32, #tpu.memory_space<vmem>>, vector<32x16xf32>
    %c128 = arith.constant 128 : index
    %c0_10 = arith.constant 0 : index
    %10 = vector.load %arg3[%c128, %c0_10] : memref<136x128xf32, #tpu.memory_space<vmem>>, vector<8x128xf32>
    %11 = vector.extract_strided_slice %10 {offsets = [0, 0], sizes = [1, 32], strides = [1, 1]} : vector<8x128xf32> to vector<1x32xf32>
    %12 = vector.extract_strided_slice %10 {offsets = [1, 0], sizes = [1, 16], strides = [1, 1]} : vector<8x128xf32> to vector<1x16xf32>
    %13 = vector.extract_strided_slice %10 {offsets = [2, 0], sizes = [1, 32], strides = [1, 1]} : vector<8x128xf32> to vector<1x32xf32>
    %14 = vector.extract_strided_slice %10 {offsets = [3, 0], sizes = [1, 16], strides = [1, 1]} : vector<8x128xf32> to vector<1x16xf32>
    %15 = vector.extract_strided_slice %10 {offsets = [4, 0], sizes = [1, 32], strides = [1, 1]} : vector<8x128xf32> to vector<1x32xf32>
    %16 = vector.extract_strided_slice %10 {offsets = [5, 0], sizes = [1, 16], strides = [1, 1]} : vector<8x128xf32> to vector<1x16xf32>
    %cst = arith.constant dense<0.000000e+00> : vector<16x32xf32>
    %17 = tpu.matmul %0, %4, %cst {dimension_numbers = #tpu.dot_dimension_numbers<[1], [0], [0], [1], [0, 0, 1, 1], [], []>} : vector<16x16xf32>, vector<16x32xf32>, vector<16x32xf32> -> vector<16x32xf32>
    %18 = vector.broadcast %11 : vector<1x32xf32> to vector<16x32xf32>
    %19 = arith.addf %17, %18 : vector<16x32xf32>
    %20 = math.tanh %19 : vector<16x32xf32>
    %cst_11 = arith.constant dense<0.000000e+00> : vector<16x16xf32>
    %21 = tpu.matmul %20, %5, %cst_11 {dimension_numbers = #tpu.dot_dimension_numbers<[1], [0], [0], [1], [0, 0, 1, 1], [], []>} : vector<16x32xf32>, vector<32x16xf32>, vector<16x16xf32> -> vector<16x16xf32>
    %22 = vector.broadcast %12 : vector<1x16xf32> to vector<16x16xf32>
    %23 = arith.addf %21, %22 : vector<16x16xf32>
    %24 = vector.extract_strided_slice %23 {offsets = [0, 0], sizes = [16, 8], strides = [1, 1]} : vector<16x16xf32> to vector<16x8xf32>
    %25 = vector.extract_strided_slice %23 {offsets = [0, 8], sizes = [16, 8], strides = [1, 1]} : vector<16x16xf32> to vector<16x8xf32>
    %cst_12 = arith.constant 5.000000e-01 : f32
    %26 = vector.broadcast %cst_12 : f32 to vector<16x8xf32>
    %27 = arith.mulf %26, %25 : vector<16x8xf32>
    %28 = math.exp %27 : vector<16x8xf32>
    %29 = arith.mulf %2, %28 : vector<16x8xf32>
    %30 = arith.addf %24, %29 : vector<16x8xf32>
    %cst_13 = arith.constant dense<0.000000e+00> : vector<16x32xf32>
    %31 = tpu.matmul %30, %6, %cst_13 {dimension_numbers = #tpu.dot_dimension_numbers<[1], [0], [0], [1], [0, 0, 1, 1], [], []>} : vector<16x8xf32>, vector<8x32xf32>, vector<16x32xf32> -> vector<16x32xf32>
    %32 = vector.broadcast %13 : vector<1x32xf32> to vector<16x32xf32>
    %33 = arith.addf %31, %32 : vector<16x32xf32>
    %34 = math.tanh %33 : vector<16x32xf32>
    %cst_14 = arith.constant dense<0.000000e+00> : vector<16x16xf32>
    %35 = tpu.matmul %34, %7, %cst_14 {dimension_numbers = #tpu.dot_dimension_numbers<[1], [0], [0], [1], [0, 0, 1, 1], [], []>} : vector<16x32xf32>, vector<32x16xf32>, vector<16x16xf32> -> vector<16x16xf32>
    %36 = vector.broadcast %14 : vector<1x16xf32> to vector<16x16xf32>
    %37 = arith.addf %35, %36 : vector<16x16xf32>
    %38 = vector.extract_strided_slice %37 {offsets = [0, 0], sizes = [16, 8], strides = [1, 1]} : vector<16x16xf32> to vector<16x8xf32>
    %39 = vector.extract_strided_slice %37 {offsets = [0, 8], sizes = [16, 8], strides = [1, 1]} : vector<16x16xf32> to vector<16x8xf32>
    %cst_15 = arith.constant 5.000000e-01 : f32
    %40 = vector.broadcast %cst_15 : f32 to vector<16x8xf32>
    %41 = arith.mulf %40, %39 : vector<16x8xf32>
    %42 = math.exp %41 : vector<16x8xf32>
    %43 = arith.mulf %3, %42 : vector<16x8xf32>
    %44 = arith.addf %38, %43 : vector<16x8xf32>
    %45 = tpu.concatenate %44, %30 in 0 : vector<16x8xf32>, vector<16x8xf32> -> vector<32x8xf32>
    %cst_16 = arith.constant dense<0.000000e+00> : vector<32x32xf32>
    %46 = tpu.matmul %45, %8, %cst_16 {dimension_numbers = #tpu.dot_dimension_numbers<[1], [0], [0], [1], [0, 0, 1, 1], [], []>} : vector<32x8xf32>, vector<8x32xf32>, vector<32x32xf32> -> vector<32x32xf32>
    %47 = vector.broadcast %15 : vector<1x32xf32> to vector<32x32xf32>
    %48 = arith.addf %46, %47 : vector<32x32xf32>
    %49 = math.tanh %48 : vector<32x32xf32>
    %cst_17 = arith.constant dense<0.000000e+00> : vector<32x16xf32>
    %50 = tpu.matmul %49, %9, %cst_17 {dimension_numbers = #tpu.dot_dimension_numbers<[1], [0], [0], [1], [0, 0, 1, 1], [], []>} : vector<32x32xf32>, vector<32x16xf32>, vector<32x16xf32> -> vector<32x16xf32>
    %51 = vector.broadcast %16 : vector<1x16xf32> to vector<32x16xf32>
    %52 = arith.addf %50, %51 : vector<32x16xf32>
    %53 = vector.extract_strided_slice %52 {offsets = [0, 0], sizes = [16, 16], strides = [1, 1]} : vector<32x16xf32> to vector<16x16xf32>
    %54 = vector.extract_strided_slice %52 {offsets = [16, 0], sizes = [16, 16], strides = [1, 1]} : vector<32x16xf32> to vector<16x16xf32>
    %cst_18 = arith.constant 0.000000e+00 : f32
    %55 = vector.broadcast %cst_18 : f32 to vector<16x64xf32>
    %56 = tpu.concatenate %53, %54, %24, %25, %38, %39, %55 in 1 : vector<16x16xf32>, vector<16x16xf32>, vector<16x8xf32>, vector<16x8xf32>, vector<16x8xf32>, vector<16x8xf32>, vector<16x64xf32> -> vector<16x128xf32>
    %c0_19 = arith.constant 0 : index
    %c0_20 = arith.constant 0 : index
    %57 = vector.load %arg4[%c0_19, %c0_20] : memref<16x128xf32, #tpu.memory_space<vmem>>, vector<16x128xf32>
    tpu.vector_store %arg4[%c0_19, %c0_20], %56 {strides = array<i32>} : memref<16x128xf32, #tpu.memory_space<vmem>>, vector<16x128xf32>,
    return
  }
  func.func @transform_0(%arg0: i32) -> (i32, i32) {
    %c0_i32 = arith.constant 0 : i32
    %c0_i32_0 = arith.constant 0 : i32
    %c0_i32_1 = arith.constant 0 : i32
    return %c0_i32, %c0_i32_0 : i32, i32
  }
  func.func @transform_1(%arg0: i32) -> (i32, i32) {
    %c0_i32 = arith.constant 0 : i32
    %c0_i32_0 = arith.constant 0 : i32
    %c0_i32_1 = arith.constant 0 : i32
    return %c0_i32, %c0_i32_0 : i32, i32
  }
  func.func @transform_2(%arg0: i32) -> (i32, i32) {
    %c0_i32 = arith.constant 0 : i32
    %c0_i32_0 = arith.constant 0 : i32
    %c0_i32_1 = arith.constant 0 : i32
    return %c0_i32, %c0_i32_0 : i32, i32
  }
  func.func @transform_3(%arg0: i32) -> (i32, i32) {
    %c0_i32 = arith.constant 0 : i32
    %c0_i32_0 = arith.constant 0 : i32
    %c0_i32_1 = arith.constant 0 : i32
    return %c0_i32, %c0_i32_0 : i32, i32
  }
}

</mosaic_0001>

<llo_original>
// kernel: tpu_custom_call.1
$region0: #{tpu_custom_call.1}
  #allocation0 [shape = 'u32[]', space=smem, size = 0x4, offset = 0x4, fixed_abs, tag = 'smem constant byte address 0x4 - core index']
  #allocation1 [shape = 'u32[144,128]{1,0:T(1,128)}', space=vmem, size = 0x12000, scoped, tag = 'internal scratch']
  %s0 = inlined_call_operand.hbm [shape: f32[16,16], index: 0, kind: input, shape index: {}]
  %s1 = inlined_call_operand.hbm [shape: f32[16,16], index: 1, kind: input, shape index: {}]
  %s2 = inlined_call_operand.hbm [shape: f32[136,128], index: 2, kind: input, shape index: {}]
  %s3 = inlined_call_operand.hbm [shape: f32[16,128], index: 3, kind: output, shape index: {}]
  %s4 = sld [smem:[#allocation0]]
  $region34: #{tpu_custom_call.1} parent=0
    _
  %s6 = ssub.s32 1, %s4
  %s7 = scalar_select 0, %s6, %s4
  $region1: #{tpu_custom_call.1} parent=0
    #allocation2 [shape = 'u8[8192]{0}', space=vmem, size = 0x2000, scoped, tag = 'input window, operand 0, single buffered']
    #allocation3 [shape = 's32[1]{0}', space=sflag, size = 0x4, scoped, tag = 'scoped memory for tpu_custom_call.1']
    #allocation4 [shape = 's32[1]{0}', space=sflag, size = 0x4, scoped, tag = 'scoped memory for tpu_custom_call.1']
    #allocation5 [shape = 'u8[8192]{0}', space=vmem, size = 0x2000, scoped, tag = 'input window, operand 1, single buffered']
    #allocation6 [shape = 's32[1]{0}', space=sflag, size = 0x4, scoped, tag = 'scoped memory for tpu_custom_call.1']
    #allocation7 [shape = 'u8[69632]{0}', space=vmem, size = 0x11000, scoped, tag = 'input window, operand 2, single buffered']
    #allocation8 [shape = 'u8[8192]{0}', space=vmem, size = 0x2000, scoped, tag = 'output window, operand 0, single buffered']
    %8 = vsyncpa [#allocation3], 0
    %9 = vsyncpa [#allocation6], 0
    %10 = vsyncpa [#allocation4], 0
    // Predicated region
    $region2: #{tpu_custom_call.1} parent=1 // pred_check
      _
    $region3: #{tpu_custom_call.1} parent=1 // pred_check_branch
      %12 = sbr.rel (0) target = $region5
    $region4: #{tpu_custom_call.1} parent=1 // pred_region
      %s14 = ssub.s32 256, 256
      %15 = vsyncadd [#allocation3], %s14
      %s16 = sshll.u32 [#allocation2], 4
      %s17 = int_to_ptr.vmem [resolvable:$true] %s16
      %22 = dma.hbm_to_vmem [thread:$0]  %s0, 256, %s17, [#allocation3], 128, 128, 8
    $region5: #{tpu_custom_call.1} parent=1 // pred_fallthru
      _
    // Predicated region
    $region6: #{tpu_custom_call.1} parent=1 // pred_check
      _
    $region7: #{tpu_custom_call.1} parent=1 // pred_check_branch
      %24 = sbr.rel (0) target = $region9
    $region8: #{tpu_custom_call.1} parent=1 // pred_region
      %s26 = ssub.s32 256, 256
      %27 = vsyncadd [#allocation6], %s26
      %s28 = sshll.u32 [#allocation5], 4
      %s29 = int_to_ptr.vmem [resolvable:$true] %s28
      %34 = dma.hbm_to_vmem [thread:$0]  %s1, 256, %s29, [#allocation6], 128, 128, 8
    $region9: #{tpu_custom_call.1} parent=1 // pred_fallthru
      _
    // Predicated region
    $region10: #{tpu_custom_call.1} parent=1 // pred_check
      _
    $region11: #{tpu_custom_call.1} parent=1 // pred_check_branch
      %36 = sbr.rel (0) target = $region13
    $region12: #{tpu_custom_call.1} parent=1 // pred_region
      %s38 = ssub.s32 2176, 2176
      %39 = vsyncadd [#allocation6], %s38
      %s40 = sshll.u32 [#allocation7], 4
      %s41 = int_to_ptr.vmem [resolvable:$true] %s40
      %46 = dma.hbm_to_vmem [thread:$0]  %s2, 2176, %s41, [#allocation6], 128, 128, 8
    $region13: #{tpu_custom_call.1} parent=1 // pred_fallthru
      _
    // Predicated region
    $region14: #{tpu_custom_call.1} parent=1 // pred_check
      _
    $region15: #{tpu_custom_call.1} parent=1 // pred_check_branch
      %48 = sbr.rel (0) target = $region17
    $region16: #{tpu_custom_call.1} parent=1 // pred_region
      %49 = dma.done [#allocation3], 256
    $region17: #{tpu_custom_call.1} parent=1 // pred_fallthru
      _
    // Predicated region
    $region18: #{tpu_custom_call.1} parent=1 // pred_check
      _
    $region19: #{tpu_custom_call.1} parent=1 // pred_check_branch
      %51 = sbr.rel (0) target = $region21
    $region20: #{tpu_custom_call.1} parent=1 // pred_region
      %52 = dma.done [#allocation6], 256
    $region21: #{tpu_custom_call.1} parent=1 // pred_fallthru
      _
    // Predicated region
    $region22: #{tpu_custom_call.1} parent=1 // pred_check
      _
    $region23: #{tpu_custom_call.1} parent=1 // pred_check_branch
      %54 = sbr.rel (0) target = $region25
    $region24: #{tpu_custom_call.1} parent=1 // pred_region
      %55 = dma.done [#allocation6], 2176
    $region25: #{tpu_custom_call.1} parent=1 // pred_fallthru
      _
    %v56 = vld [vmem:[#allocation2] sm:$0xff]
    %v57 = vld [vmem:[#allocation2 + $0x8] sm:$0xff]
    %v58 = vld [vmem:[#allocation5] sm:$0xff]
    %v59 = vld [vmem:[#allocation5 + $0x8] sm:$0xff]
    %v60 = vld [vmem:[#allocation7] sm:$0xff]
    %v61 = vld [vmem:[#allocation7 + $0x8] sm:$0xff]
    %v62 = vld [vmem:[#allocation7 + $0x10] sm:$0xff]
    %v63 = vld [vmem:[#allocation7 + $0x18] sm:$0xff]
    %v64 = vld [vmem:[#allocation7 + $0x20] sm:$0xff]
    %v65 = vld [vmem:[#allocation7 + $0x28] sm:$0xff]
    %v66 = vld [vmem:[#allocation7 + $0x30] sm:$0xff]
    %v67 = vld [vmem:[#allocation7 + $0x38] sm:$0xff]
    %v68 = vld [vmem:[#allocation7 + $0x40] sm:$0xff]
    %v69 = vld [vmem:[#allocation7 + $0x48] sm:$0xff]
    %v70 = vld [vmem:[#allocation7 + $0x50] sm:$0xff]
    %v71 = vld [vmem:[#allocation7 + $0x58] sm:$0xff]
    %v72 = vld [vmem:[#allocation7 + $0x60] sm:$0xff]
    %v73 = vld [vmem:[#allocation7 + $0x68] sm:$0xff]
    %v74 = vld [vmem:[#allocation7 + $0x70] sm:$0xff]
    %v75 = vld [vmem:[#allocation7 + $0x78] sm:$0xff]
    %v76 = vld [vmem:[#allocation7 + $0x80] sm:$0xff]
    %v77 = vlaneseq
    %v78 = vshrl.u32 %v77, 7
    %v79 = vsub.s32 0, %v78
    %v80 = vrot.slane %v76, %v79
    %vm81 = vcmask 130048
    %v83 = vsel %vm81, %v56, 0
    %v86 = vsel %vm81, %v57, 0
    %88 = vmatprep.subr.mxu0 0.0
    %89 = vmatpush1.msra.mxu0 %v60
    %90 = vmatprep.subr.mxu0 0.0
    %91 = vmatpush1.msra.mxu0 %v61
    %92 = vmatprep.subr.mxu0 0.0
    %93 = vmatpush1.msra.mxu0 0.0
    %94 = vmatprep.subr.mxu0 0.0
    %95 = vmatpush1.msra.mxu0 0.0
    %96 = vmatprep.subr.mxu0 0.0
    %97 = vmatpush1.msra.mxu0 0.0
    %98 = vmatprep.subr.mxu0 0.0
    %99 = vmatpush1.msra.mxu0 0.0
    %100 = vmatprep.subr.mxu0 0.0
    %101 = vmatpush1.msra.mxu0 0.0
    %102 = vmatprep.subr.mxu0 0.0
    %103 = vmatpush1.msra.mxu0 0.0
    %104 = vmatprep.subr.mxu0 0.0
    %105 = vmatpush1.msra.mxu0 0.0
    %106 = vmatprep.subr.mxu0 0.0
    %107 = vmatpush1.msra.mxu0 0.0
    %108 = vmatprep.subr.mxu0 0.0
    %109 = vmatpush1.msra.mxu0 0.0
    %110 = vmatprep.subr.mxu0 0.0
    %111 = vmatpush1.msra.mxu0 0.0
    %112 = vmatprep.subr.mxu0 0.0
    %113 = vmatpush1.msra.mxu0 0.0
    %114 = vmatprep.subr.mxu0 0.0
    %115 = vmatpush1.msra.mxu0 0.0
    %116 = vmatprep.subr.mxu0 0.0
    %117 = vmatpush1.msra.mxu0 0.0
    %118 = vmatprep.subr.mxu0 0.0
    %119 = vmatpush1.msra.mxu0 0.0
    %120 = vmatprep.subr.mxu0 0.0
    %121 = vmatpush1.msra.mxu0 0.0
    %122 = vmatprep.subr.mxu0 0.0
    %123 = vmatpush1.msra.mxu0 0.0
    %124 = vmatprep.subr.mxu0 0.0
    %125 = vmatpush1.msra.mxu0 0.0
    %126 = vmatprep.subr.mxu0 0.0
    %127 = vmatpush1.msra.mxu0 0.0
    %128 = vmatprep.subr.mxu0 0.0
    %129 = vmatpush1.msra.mxu0 0.0
    %130 = vmatprep.subr.mxu0 0.0
    %131 = vmatpush1.msra.mxu0 0.0
    %132 = vmatprep.subr.mxu0 0.0
    %133 = vmatpush1.msra.mxu0 0.0
    %134 = vmatprep.subr.mxu0 0.0
    %135 = vmatpush1.msra.mxu0 0.0
    %136 = vmatprep.subr.mxu0 0.0
    %137 = vmatpush1.msra.mxu0 0.0
    %138 = vmatprep.subr.mxu0 0.0
    %139 = vmatpush1.msra.mxu0 0.0
    %140 = vmatprep.subr.mxu0 0.0
    %141 = vmatpush1.msra.mxu0 0.0
    %142 = vmatprep.subr.mxu0 0.0
    %143 = vmatpush1.msra.mxu0 0.0
    %144 = vmatprep.subr.mxu0 0.0
    %145 = vmatpush1.msra.mxu0 0.0
    %146 = vmatprep.subr.mxu0 0.0
    %147 = vmatpush1.msra.mxu0 0.0
    %148 = vmatprep.subr.mxu0 0.0
    %149 = vmatpush1.msra.mxu0 0.0
    %150 = vmatprep.subr.mxu0 0.0
    %151 = vmatpush1.msra.mxu0 0.0
    %152 = vmatprep.mubr.f32.mxu0 0.0
    %153 = vmatmul.mubr.f32.gmra.mrb[0].mxu0 %v83
    %v154 = vpop.f32.mrb[0].mxu0
    %v155 = vadd.f32 %v80, %v154
    %v156 = vpop.f32.mrb[0].mxu0
    %157 = vmatprep.mubr.f32.mxu0 0.0
    %158 = vmatmul.mubr.f32.gmra.mrb[0].mxu0 %v86
    %v159 = vpop.f32.mrb[0].mxu0
    %v160 = vadd.f32 %v80, %v159
    %v161 = vpop.f32.mrb[0].mxu0
    %162 = vdwg.mxu0
    %v163 = vtanh.pop %v155
    %v164 = vtanh.pop %v160
    %v165 = vlaneseq
    %v166 = vshrl.u32 %v165, 7
    %v167 = vsub.s32 1, %v166
    %v168 = vrot.slane %v76, %v167
    %vm169 = vcmask 261120
    %v171 = vsel %vm169, %v163, 0
    %v174 = vsel %vm169, %v164, 0
    %176 = vmatprep.subr.mxu0 0.0
    %177 = vmatpush1.msra.mxu0 %v62
    %178 = vmatprep.subr.mxu0 0.0
    %179 = vmatpush1.msra.mxu0 %v63
    %180 = vmatprep.subr.mxu0 0.0
    %181 = vmatpush1.msra.mxu0 %v64
    %182 = vmatprep.subr.mxu0 0.0
    %183 = vmatpush1.msra.mxu0 %v65
    %184 = vmatprep.subr.mxu0 0.0
    %185 = vmatpush1.msra.mxu0 0.0
    %186 = vmatprep.subr.mxu0 0.0
    %187 = vmatpush1.msra.mxu0 0.0
    %188 = vmatprep.subr.mxu0 0.0
    %189 = vmatpush1.msra.mxu0 0.0
    %190 = vmatprep.subr.mxu0 0.0
    %191 = vmatpush1.msra.mxu0 0.0
    %192 = vmatprep.subr.mxu0 0.0
    %193 = vmatpush1.msra.mxu0 0.0
    %194 = vmatprep.subr.mxu0 0.0
    %195 = vmatpush1.msra.mxu0 0.0
    %196 = vmatprep.subr.mxu0 0.0
    %197 = vmatpush1.msra.mxu0 0.0
    %198 = vmatprep.subr.mxu0 0.0
    %199 = vmatpush1.msra.mxu0 0.0
    %200 = vmatprep.subr.mxu0 0.0
    %201 = vmatpush1.msra.mxu0 0.0
    %202 = vmatprep.subr.mxu0 0.0
    %203 = vmatpush1.msra.mxu0 0.0
    %204 = vmatprep.subr.mxu0 0.0
    %205 = vmatpush1.msra.mxu0 0.0
    %206 = vmatprep.subr.mxu0 0.0
    %207 = vmatpush1.msra.mxu0 0.0
    %208 = vmatprep.subr.mxu0 0.0
    %209 = vmatpush1.msra.mxu0 0.0
    %210 = vmatprep.subr.mxu0 0.0
    %211 = vmatpush1.msra.mxu0 0.0
    %212 = vmatprep.subr.mxu0 0.0
    %213 = vmatpush1.msra.mxu0 0.0
    %214 = vmatprep.subr.mxu0 0.0
    %215 = vmatpush1.msra.mxu0 0.0
    %216 = vmatprep.subr.mxu0 0.0
    %217 = vmatpush1.msra.mxu0 0.0
    %218 = vmatprep.subr.mxu0 0.0
    %219 = vmatpush1.msra.mxu0 0.0
    %220 = vmatprep.subr.mxu0 0.0
    %221 = vmatpush1.msra.mxu0 0.0
    %222 = vmatprep.subr.mxu0 0.0
    %223 = vmatpush1.msra.mxu0 0.0
    %224 = vmatprep.subr.mxu0 0.0
    %225 = vmatpush1.msra.mxu0 0.0
    %226 = vmatprep.subr.mxu0 0.0
    %227 = vmatpush1.msra.mxu0 0.0
    %228 = vmatprep.subr.mxu0 0.0
    %229 = vmatpush1.msra.mxu0 0.0
    %230 = vmatprep.subr.mxu0 0.0
    %231 = vmatpush1.msra.mxu0 0.0
    %232 = vmatprep.subr.mxu0 0.0
    %233 = vmatpush1.msra.mxu0 0.0
    %234 = vmatprep.subr.mxu0 0.0
    %235 = vmatpush1.msra.mxu0 0.0
    %236 = vmatprep.subr.mxu0 0.0
    %237 = vmatpush1.msra.mxu0 0.0
    %238 = vmatprep.subr.mxu0 0.0
    %239 = vmatpush1.msra.mxu0 0.0
    %240 = vmatprep.mubr.f32.mxu0 0.0
    %241 = vmatmul.mubr.f32.gmra.mrb[0].mxu0 %v171
    %v242 = vpop.f32.mrb[0].mxu0
    %v243 = vadd.f32 %v168, %v242
    %v244 = vpop.f32.mrb[0].mxu0
    %245 = vmatprep.mubr.f32.mxu0 0.0
    %246 = vmatmul.mubr.f32.gmra.mrb[0].mxu0 %v174
    %v247 = vpop.f32.mrb[0].mxu0
    %v248 = vadd.f32 %v168, %v247
    %v249 = vpop.f32.mrb[0].mxu0
    %250 = vdwg.mxu0
    %v251 = vmul.f32 %v243, 0.5
    %v252 = vmul.f32 %v248, 0.5
    %v253 = vmul.f32 %v251, 1.442695
    %v254 = vpow.pop %v253
    %v255 = vmul.f32 %v252, 1.442695
    %v256 = vpow.pop %v255
    %259 = vrot.lane.b32.xlu0 %v254, 120
    %v260 = vpop.permute.xlu0 %259
    %261 = vrot.lane.b32.xlu0 %v256, 120
    %v262 = vpop.permute.xlu0 %261
    %v265 = vmul.f32 %v58, %v260
    %v266 = vmul.f32 %v59, %v262
    %v267 = vadd.f32 %v243, %v265
    %v268 = vadd.f32 %v248, %v266
    %v269 = vlaneseq
    %v270 = vshrl.u32 %v269, 7
    %v271 = vsub.s32 2, %v270
    %v272 = vrot.slane %v76, %v271
    %vm273 = vcmask 64512
    %v275 = vsel %vm273, %v267, 0
    %v278 = vsel %vm273, %v268, 0
    %280 = vmatprep.subr.mxu0 0.0
    %281 = vmatpush1.msra.mxu0 %v66
    %282 = vmatprep.subr.mxu0 0.0
    %283 = vmatpush1.msra.mxu0 0.0
    %284 = vmatprep.subr.mxu0 0.0
    %285 = vmatpush1.msra.mxu0 0.0
    %286 = vmatprep.subr.mxu0 0.0
    %287 = vmatpush1.msra.mxu0 0.0
    %288 = vmatprep.subr.mxu0 0.0
    %289 = vmatpush1.msra.mxu0 0.0
    %290 = vmatprep.subr.mxu0 0.0
    %291 = vmatpush1.msra.mxu0 0.0
    %292 = vmatprep.subr.mxu0 0.0
    %293 = vmatpush1.msra.mxu0 0.0
    %294 = vmatprep.subr.mxu0 0.0
    %295 = vmatpush1.msra.mxu0 0.0
    %296 = vmatprep.subr.mxu0 0.0
    %297 = vmatpush1.msra.mxu0 0.0
    %298 = vmatprep.subr.mxu0 0.0
    %299 = vmatpush1.msra.mxu0 0.0
    %300 = vmatprep.subr.mxu0 0.0
    %301 = vmatpush1.msra.mxu0 0.0
    %302 = vmatprep.subr.mxu0 0.0
    %303 = vmatpush1.msra.mxu0 0.0
    %304 = vmatprep.subr.mxu0 0.0
    %305 = vmatpush1.msra.mxu0 0.0
    %306 = vmatprep.subr.mxu0 0.0
    %307 = vmatpush1.msra.mxu0 0.0
    %308 = vmatprep.subr.mxu0 0.0
    %309 = vmatpush1.msra.mxu0 0.0
    %310 = vmatprep.subr.mxu0 0.0
    %311 = vmatpush1.msra.mxu0 0.0
    %312 = vmatprep.subr.mxu0 0.0
    %313 = vmatpush1.msra.mxu0 0.0
    %314 = vmatprep.subr.mxu0 0.0
    %315 = vmatpush1.msra.mxu0 0.0
    %316 = vmatprep.subr.mxu0 0.0
    %317 = vmatpush1.msra.mxu0 0.0
    %318 = vmatprep.subr.mxu0 0.0
    %319 = vmatpush1.msra.mxu0 0.0
    %320 = vmatprep.subr.mxu0 0.0
    %321 = vmatpush1.msra.mxu0 0.0
    %322 = vmatprep.subr.mxu0 0.0
    %323 = vmatpush1.msra.mxu0 0.0
    %324 = vmatprep.subr.mxu0 0.0
    %325 = vmatpush1.msra.mxu0 0.0
    %326 = vmatprep.subr.mxu0 0.0
    %327 = vmatpush1.msra.mxu0 0.0
    %328 = vmatprep.subr.mxu0 0.0
    %329 = vmatpush1.msra.mxu0 0.0
    %330 = vmatprep.subr.mxu0 0.0
    %331 = vmatpush1.msra.mxu0 0.0
    %332 = vmatprep.subr.mxu0 0.0
    %333 = vmatpush1.msra.mxu0 0.0
    %334 = vmatprep.subr.mxu0 0.0
    %335 = vmatpush1.msra.mxu0 0.0
    %336 = vmatprep.subr.mxu0 0.0
    %337 = vmatpush1.msra.mxu0 0.0
    %338 = vmatprep.subr.mxu0 0.0
    %339 = vmatpush1.msra.mxu0 0.0
    %340 = vmatprep.subr.mxu0 0.0
    %341 = vmatpush1.msra.mxu0 0.0
    %342 = vmatprep.subr.mxu0 0.0
    %343 = vmatpush1.msra.mxu0 0.0
    %344 = vmatprep.mubr.f32.mxu0 0.0
    %345 = vmatmul.mubr.f32.gmra.mrb[0].mxu0 %v275
    %v346 = vpop.f32.mrb[0].mxu0
    %v347 = vadd.f32 %v272, %v346
    %v348 = vpop.f32.mrb[0].mxu0
    %349 = vmatprep.mubr.f32.mxu0 0.0
    %350 = vmatmul.mubr.f32.gmra.mrb[0].mxu0 %v278
    %v351 = vpop.f32.mrb[0].mxu0
    %v352 = vadd.f32 %v272, %v351
    %v353 = vpop.f32.mrb[0].mxu0
    %354 = vdwg.mxu0
    %v355 = vtanh.pop %v347
    %v356 = vtanh.pop %v352
    %v357 = vlaneseq
    %v358 = vshrl.u32 %v357, 7
    %v359 = vsub.s32 3, %v358
    %v360 = vrot.slane %v76, %v359
    %v362 = vsel %vm169, %v355, 0
    %v365 = vsel %vm169, %v356, 0
    %367 = vmatprep.subr.mxu0 0.0
    %368 = vmatpush1.msra.mxu0 %v67
    %369 = vmatprep.subr.mxu0 0.0
    %370 = vmatpush1.msra.mxu0 %v68
    %371 = vmatprep.subr.mxu0 0.0
    %372 = vmatpush1.msra.mxu0 %v69
    %373 = vmatprep.subr.mxu0 0.0
    %374 = vmatpush1.msra.mxu0 %v70
    %375 = vmatprep.subr.mxu0 0.0
    %376 = vmatpush1.msra.mxu0 0.0
    %377 = vmatprep.subr.mxu0 0.0
    %378 = vmatpush1.msra.mxu0 0.0
    %379 = vmatprep.subr.mxu0 0.0
    %380 = vmatpush1.msra.mxu0 0.0
    %381 = vmatprep.subr.mxu0 0.0
    %382 = vmatpush1.msra.mxu0 0.0
    %383 = vmatprep.subr.mxu0 0.0
    %384 = vmatpush1.msra.mxu0 0.0
    %385 = vmatprep.subr.mxu0 0.0
    %386 = vmatpush1.msra.mxu0 0.0
    %387 = vmatprep.subr.mxu0 0.0
    %388 = vmatpush1.msra.mxu0 0.0
    %389 = vmatprep.subr.mxu0 0.0
    %390 = vmatpush1.msra.mxu0 0.0
    %391 = vmatprep.subr.mxu0 0.0
    %392 = vmatpush1.msra.mxu0 0.0
    %393 = vmatprep.subr.mxu0 0.0
    %394 = vmatpush1.msra.mxu0 0.0
    %395 = vmatprep.subr.mxu0 0.0
    %396 = vmatpush1.msra.mxu0 0.0
    %397 = vmatprep.subr.mxu0 0.0
    %398 = vmatpush1.msra.mxu0 0.0
    %399 = vmatprep.subr.mxu0 0.0
    %400 = vmatpush1.msra.mxu0 0.0
    %401 = vmatprep.subr.mxu0 0.0
    %402 = vmatpush1.msra.mxu0 0.0
    %403 = vmatprep.subr.mxu0 0.0
    %404 = vmatpush1.msra.mxu0 0.0
    %405 = vmatprep.subr.mxu0 0.0
    %406 = vmatpush1.msra.mxu0 0.0
    %407 = vmatprep.subr.mxu0 0.0
    %408 = vmatpush1.msra.mxu0 0.0
    %409 = vmatprep.subr.mxu0 0.0
    %410 = vmatpush1.msra.mxu0 0.0
    %411 = vmatprep.subr.mxu0 0.0
    %412 = vmatpush1.msra.mxu0 0.0
    %413 = vmatprep.subr.mxu0 0.0
    %414 = vmatpush1.msra.mxu0 0.0
    %415 = vmatprep.subr.mxu0 0.0
    %416 = vmatpush1.msra.mxu0 0.0
    %417 = vmatprep.subr.mxu0 0.0
    %418 = vmatpush1.msra.mxu0 0.0
    %419 = vmatprep.subr.mxu0 0.0
    %420 = vmatpush1.msra.mxu0 0.0
    %421 = vmatprep.subr.mxu0 0.0
    %422 = vmatpush1.msra.mxu0 0.0
    %423 = vmatprep.subr.mxu0 0.0
    %424 = vmatpush1.msra.mxu0 0.0
    %425 = vmatprep.subr.mxu0 0.0
    %426 = vmatpush1.msra.mxu0 0.0
    %427 = vmatprep.subr.mxu0 0.0
    %428 = vmatpush1.msra.mxu0 0.0
    %429 = vmatprep.subr.mxu0 0.0
    %430 = vmatpush1.msra.mxu0 0.0
    %431 = vmatprep.mubr.f32.mxu0 0.0
    %432 = vmatmul.mubr.f32.gmra.mrb[0].mxu0 %v362
    %v433 = vpop.f32.mrb[0].mxu0
    %v434 = vadd.f32 %v360, %v433
    %v435 = vpop.f32.mrb[0].mxu0
    %436 = vmatprep.mubr.f32.mxu0 0.0
    %437 = vmatmul.mubr.f32.gmra.mrb[0].mxu0 %v365
    %v438 = vpop.f32.mrb[0].mxu0
    %v439 = vadd.f32 %v360, %v438
    %v440 = vpop.f32.mrb[0].mxu0
    %441 = vdwg.mxu0
    %v442 = vmul.f32 %v434, 0.5
    %v443 = vmul.f32 %v439, 0.5
    %v444 = vmul.f32 %v442, 1.442695
    %v445 = vpow.pop %v444
    %v446 = vmul.f32 %v443, 1.442695
    %v447 = vpow.pop %v446
    %v448 = vmul.f32 %v58, %v445
    %v449 = vmul.f32 %v59, %v447
    %452 = vrot.lane.b32.xlu0 %v448, 120
    %v453 = vpop.permute.xlu0 %452
    %454 = vrot.lane.b32.xlu0 %v449, 120
    %v455 = vpop.permute.xlu0 %454
    %v458 = vadd.f32 %v434, %v453
    %v459 = vadd.f32 %v439, %v455
    %v460 = vlaneseq
    %v461 = vshrl.u32 %v460, 7
    %v462 = vsub.s32 4, %v461
    %v463 = vrot.slane %v76, %v462
    %v465 = vsel %vm273, %v458, 0
    %v468 = vsel %vm273, %v459, 0
    %470 = vmatprep.subr.mxu0 0.0
    %471 = vmatpush1.msra.mxu0 %v71
    %472 = vmatprep.subr.mxu0 0.0
    %473 = vmatpush1.msra.mxu0 0.0
    %474 = vmatprep.subr.mxu0 0.0
    %475 = vmatpush1.msra.mxu0 0.0
    %476 = vmatprep.subr.mxu0 0.0
    %477 = vmatpush1.msra.mxu0 0.0
    %478 = vmatprep.subr.mxu0 0.0
    %479 = vmatpush1.msra.mxu0 0.0
    %480 = vmatprep.subr.mxu0 0.0
    %481 = vmatpush1.msra.mxu0 0.0
    %482 = vmatprep.subr.mxu0 0.0
    %483 = vmatpush1.msra.mxu0 0.0
    %484 = vmatprep.subr.mxu0 0.0
    %485 = vmatpush1.msra.mxu0 0.0
    %486 = vmatprep.subr.mxu0 0.0
    %487 = vmatpush1.msra.mxu0 0.0
    %488 = vmatprep.subr.mxu0 0.0
    %489 = vmatpush1.msra.mxu0 0.0
    %490 = vmatprep.subr.mxu0 0.0
    %491 = vmatpush1.msra.mxu0 0.0
    %492 = vmatprep.subr.mxu0 0.0
    %493 = vmatpush1.msra.mxu0 0.0
    %494 = vmatprep.subr.mxu0 0.0
    %495 = vmatpush1.msra.mxu0 0.0
    %496 = vmatprep.subr.mxu0 0.0
    %497 = vmatpush1.msra.mxu0 0.0
    %498 = vmatprep.subr.mxu0 0.0
    %499 = vmatpush1.msra.mxu0 0.0
    %500 = vmatprep.subr.mxu0 0.0
    %501 = vmatpush1.msra.mxu0 0.0
    %502 = vmatprep.subr.mxu0 0.0
    %503 = vmatpush1.msra.mxu0 0.0
    %504 = vmatprep.subr.mxu0 0.0
    %505 = vmatpush1.msra.mxu0 0.0
    %506 = vmatprep.subr.mxu0 0.0
    %507 = vmatpush1.msra.mxu0 0.0
    %508 = vmatprep.subr.mxu0 0.0
    %509 = vmatpush1.msra.mxu0 0.0
    %510 = vmatprep.subr.mxu0 0.0
    %511 = vmatpush1.msra.mxu0 0.0
    %512 = vmatprep.subr.mxu0 0.0
    %513 = vmatpush1.msra.mxu0 0.0
    %514 = vmatprep.subr.mxu0 0.0
    %515 = vmatpush1.msra.mxu0 0.0
    %516 = vmatprep.subr.mxu0 0.0
    %517 = vmatpush1.msra.mxu0 0.0
    %518 = vmatprep.subr.mxu0 0.0
    %519 = vmatpush1.msra.mxu0 0.0
    %520 = vmatprep.subr.mxu0 0.0
    %521 = vmatpush1.msra.mxu0 0.0
    %522 = vmatprep.subr.mxu0 0.0
    %523 = vmatpush1.msra.mxu0 0.0
    %524 = vmatprep.subr.mxu0 0.0
    %525 = vmatpush1.msra.mxu0 0.0
    %526 = vmatprep.subr.mxu0 0.0
    %527 = vmatpush1.msra.mxu0 0.0
    %528 = vmatprep.subr.mxu0 0.0
    %529 = vmatpush1.msra.mxu0 0.0
    %530 = vmatprep.subr.mxu0 0.0
    %531 = vmatpush1.msra.mxu0 0.0
    %532 = vmatprep.subr.mxu0 0.0
    %533 = vmatpush1.msra.mxu0 0.0
    %534 = vmatprep.mubr.f32.mxu0 0.0
    %535 = vmatmul.mubr.f32.gmra.mrb[0].mxu0 %v465
    %v536 = vpop.f32.mrb[0].mxu0
    %v537 = vadd.f32 %v463, %v536
    %v538 = vpop.f32.mrb[0].mxu0
    %539 = vmatprep.mubr.f32.mxu0 0.0
    %540 = vmatmul.mubr.f32.gmra.mrb[0].mxu0 %v468
    %v541 = vpop.f32.mrb[0].mxu0
    %v542 = vadd.f32 %v463, %v541
    %v543 = vpop.f32.mrb[0].mxu0
    %544 = vmatprep.mubr.f32.mxu0 0.0
    %545 = vmatmul.mubr.f32.gmra.mrb[0].mxu0 %v275
    %v546 = vpop.f32.mrb[0].mxu0
    %v547 = vadd.f32 %v463, %v546
    %v548 = vpop.f32.mrb[0].mxu0
    %549 = vmatprep.mubr.f32.mxu0 0.0
    %550 = vmatmul.mubr.f32.gmra.mrb[0].mxu0 %v278
    %v551 = vpop.f32.mrb[0].mxu0
    %v552 = vadd.f32 %v463, %v551
    %v553 = vpop.f32.mrb[0].mxu0
    %554 = vdwg.mxu0
    %v555 = vtanh.pop %v537
    %v556 = vtanh.pop %v542
    %v557 = vtanh.pop %v547
    %v558 = vtanh.pop %v552
    %v559 = vlaneseq
    %v560 = vshrl.u32 %v559, 7
    %v561 = vsub.s32 5, %v560
    %v562 = vrot.slane %v76, %v561
    %v564 = vsel %vm169, %v555, 0
    %v567 = vsel %vm169, %v556, 0
    %v570 = vsel %vm169, %v557, 0
    %v573 = vsel %vm169, %v558, 0
    %575 = vmatprep.subr.mxu0 0.0
    %576 = vmatpush1.msra.mxu0 %v72
    %577 = vmatprep.subr.mxu0 0.0
    %578 = vmatpush1.msra.mxu0 %v73
    %579 = vmatprep.subr.mxu0 0.0
    %580 = vmatpush1.msra.mxu0 %v74
    %581 = vmatprep.subr.mxu0 0.0
    %582 = vmatpush1.msra.mxu0 %v75
    %583 = vmatprep.subr.mxu0 0.0
    %584 = vmatpush1.msra.mxu0 0.0
    %585 = vmatprep.subr.mxu0 0.0
    %586 = vmatpush1.msra.mxu0 0.0
    %587 = vmatprep.subr.mxu0 0.0
    %588 = vmatpush1.msra.mxu0 0.0
    %589 = vmatprep.subr.mxu0 0.0
    %590 = vmatpush1.msra.mxu0 0.0
    %591 = vmatprep.subr.mxu0 0.0
    %592 = vmatpush1.msra.mxu0 0.0
    %593 = vmatprep.subr.mxu0 0.0
    %594 = vmatpush1.msra.mxu0 0.0
    %595 = vmatprep.subr.mxu0 0.0
    %596 = vmatpush1.msra.mxu0 0.0
    %597 = vmatprep.subr.mxu0 0.0
    %598 = vmatpush1.msra.mxu0 0.0
    %599 = vmatprep.subr.mxu0 0.0
    %600 = vmatpush1.msra.mxu0 0.0
    %601 = vmatprep.subr.mxu0 0.0
    %602 = vmatpush1.msra.mxu0 0.0
    %603 = vmatprep.subr.mxu0 0.0
    %604 = vmatpush1.msra.mxu0 0.0
    %605 = vmatprep.subr.mxu0 0.0
    %606 = vmatpush1.msra.mxu0 0.0
    %607 = vmatprep.subr.mxu0 0.0
    %608 = vmatpush1.msra.mxu0 0.0
    %609 = vmatprep.subr.mxu0 0.0
    %610 = vmatpush1.msra.mxu0 0.0
    %611 = vmatprep.subr.mxu0 0.0
    %612 = vmatpush1.msra.mxu0 0.0
    %613 = vmatprep.subr.mxu0 0.0
    %614 = vmatpush1.msra.mxu0 0.0
    %615 = vmatprep.subr.mxu0 0.0
    %616 = vmatpush1.msra.mxu0 0.0
    %617 = vmatprep.subr.mxu0 0.0
    %618 = vmatpush1.msra.mxu0 0.0
    %619 = vmatprep.subr.mxu0 0.0
    %620 = vmatpush1.msra.mxu0 0.0
    %621 = vmatprep.subr.mxu0 0.0
    %622 = vmatpush1.msra.mxu0 0.0
    %623 = vmatprep.subr.mxu0 0.0
    %624 = vmatpush1.msra.mxu0 0.0
    %625 = vmatprep.subr.mxu0 0.0
    %626 = vmatpush1.msra.mxu0 0.0
    %627 = vmatprep.subr.mxu0 0.0
    %628 = vmatpush1.msra.mxu0 0.0
    %629 = vmatprep.subr.mxu0 0.0
    %630 = vmatpush1.msra.mxu0 0.0
    %631 = vmatprep.subr.mxu0 0.0
    %632 = vmatpush1.msra.mxu0 0.0
    %633 = vmatprep.subr.mxu0 0.0
    %634 = vmatpush1.msra.mxu0 0.0
    %635 = vmatprep.subr.mxu0 0.0
    %636 = vmatpush1.msra.mxu0 0.0
    %637 = vmatprep.subr.mxu0 0.0
    %638 = vmatpush1.msra.mxu0 0.0
    %639 = vmatprep.mubr.f32.mxu0 0.0
    %640 = vmatmul.mubr.f32.gmra.mrb[0].mxu0 %v564
    %v641 = vpop.f32.mrb[0].mxu0
    %v642 = vadd.f32 %v562, %v641
    %v643 = vpop.f32.mrb[0].mxu0
    %644 = vmatprep.mubr.f32.mxu0 0.0
    %645 = vmatmul.mubr.f32.gmra.mrb[0].mxu0 %v567
    %v646 = vpop.f32.mrb[0].mxu0
    %v647 = vadd.f32 %v562, %v646
    %v648 = vpop.f32.mrb[0].mxu0
    %649 = vmatprep.mubr.f32.mxu0 0.0
    %650 = vmatmul.mubr.f32.gmra.mrb[0].mxu0 %v570
    %v651 = vpop.f32.mrb[0].mxu0
    %v652 = vadd.f32 %v562, %v651
    %v653 = vpop.f32.mrb[0].mxu0
    %654 = vmatprep.mubr.f32.mxu0 0.0
    %655 = vmatmul.mubr.f32.gmra.mrb[0].mxu0 %v573
    %v656 = vpop.f32.mrb[0].mxu0
    %v657 = vadd.f32 %v562, %v656
    %v658 = vpop.f32.mrb[0].mxu0
    %659 = vdwg.mxu0
    %662 = vrot.lane.b32.xlu0 %v652, 16
    %v663 = vpop.permute.xlu0 %662
    %664 = vrot.lane.b32.xlu0 %v657, 16
    %v665 = vpop.permute.xlu0 %664
    %670 = vrot.lane.b32.xlu0 %v243, 32
    %v671 = vpop.permute.xlu0 %670
    %672 = vrot.lane.b32.xlu0 %v248, 32
    %v673 = vpop.permute.xlu0 %672
    %678 = vrot.lane.b32.xlu0 %v434, 48
    %v679 = vpop.permute.xlu0 %678
    %680 = vrot.lane.b32.xlu0 %v439, 48
    %v681 = vpop.permute.xlu0 %680
    %v684 = vsel %vm81, %v642, %v663
    %v685 = vsel %vm81, %v647, %v665
    %v686 = vsel %vm169, %v684, %v671
    %v687 = vsel %vm169, %v685, %v673
    %vm688 = vcmask 326656
    %v689 = vsel %vm688, %v686, %v671
    %v690 = vsel %vm688, %v687, %v673
    %vm691 = vcmask 392192
    %v692 = vsel %vm691, %v689, %v679
    %v693 = vsel %vm691, %v690, %v681
    %vm694 = vcmask 457728
    %v695 = vsel %vm694, %v692, %v679
    %v696 = vsel %vm694, %v693, %v681
    %vm697 = vcmask 523264
    %v698 = vsel %vm697, %v695, 0.0
    %v699 = vsel %vm697, %v696, 0.0
    %700 = vst [vmem:[#allocation8] sm:$0xff] %v698
    %701 = vst [vmem:[#allocation8 + $0x8] sm:$0xff] %v699
    // Predicated region
    $region26: #{tpu_custom_call.1} parent=1 // pred_check
      _
    $region27: #{tpu_custom_call.1} parent=1 // pred_check_branch
      %703 = sbr.rel (0) target = $region29
    $region28: #{tpu_custom_call.1} parent=1 // pred_region
      %s705 = ssub.s32 256, 256
      %706 = vsyncadd [#allocation4], %s705
      %s707 = sshll.u32 [#allocation8], 4
      %s708 = int_to_ptr.vmem [resolvable:$true] %s707
      %713 = dma.vmem_to_hbm [thread:$0]  %s708, 256, %s3, [#allocation4], 128, 128, 8
    $region29: #{tpu_custom_call.1} parent=1 // pred_fallthru
      _
    // Predicated region
    $region30: #{tpu_custom_call.1} parent=1 // pred_check
      _
    $region31: #{tpu_custom_call.1} parent=1 // pred_check_branch
      %715 = sbr.rel (0) target = $region33
    $region32: #{tpu_custom_call.1} parent=1 // pred_region
      %716 = dma.done [#allocation4], 256
    $region33: #{tpu_custom_call.1} parent=1 // pred_fallthru
      _
    %717 = vsyncpa [#allocation3], 1
    %718 = vsyncpa [#allocation6], 1
    %719 = vsyncpa [#allocation4], 1

</llo_original>
